<compile_context>
chip_gen: v7x
topology: tpu7x:2x2x1
jax: 0.10.0
libtpu: 0.0.40
codegen_flags: <defaults>
</compile_context>

<pallas_src>
import jax
import jax.numpy as jnp
from jax.experimental import pallas as pl
from jax.experimental.pallas import tpu as pltpu


def emb_kernel(patches_ref, w_ref, pos_ref, o_ref):
    # patches_ref: (B_blk, N, Cpp)  compute dtype (bf16)
    # w_ref:       (Cpp, hidden)    compute dtype (bf16)
    # pos_ref:     (N+1, hidden)    f32, row 0 = pos[0]+cls, rows 1.. = pos[1:]+bias
    # o_ref:       (B_blk, N+1, hidden)
    bb, n, cpp = patches_ref.shape

    # One large (B_blk*N, Cpp) @ (Cpp, hidden) MXU matmul, f32 accumulation.
    lhs = patches_ref[...].reshape(bb * n, cpp)
    emb = jnp.dot(lhs, w_ref[...], preferred_element_type=jnp.float32)

    cls_row = pos_ref[0:1, :]   # (1, hidden) f32: pos[0] + cls token
    pos_rest = pos_ref[1:, :]   # (N, hidden) f32: pos[1:] + conv bias

    # B_blk is small and static -> unrolled loop; only 2-D vector ops/stores.
    for b in range(bb):
        o_ref[b, 0:1, :] = cls_row.astype(o_ref.dtype)
        o_ref[b, 1:, :] = (emb[b * n:(b + 1) * n, :] + pos_rest).astype(o_ref.dtype)


def _choose_batch_block(bs, N, Cpp, hidden, in_bytes, out_bytes, budget_bytes):
    """Largest divisor of bs whose double-buffered streaming blocks fit the VMEM
    budget; stop growing once the matmul M dim (B_blk*N) comfortably fills the
    256-wide MXU (v6e/v7x)."""
    best = 1
    for cand in range(1, bs + 1):
        if bs % cand:
            continue
        need = (2 * cand * N * Cpp * in_bytes
                + 2 * cand * (N + 1) * hidden * out_bytes)
        if need > budget_bytes:
            break
        best = cand
        if cand * N >= 1024:  # plenty of rows per MXU push
            break
    return best


def emb_forward(x, conv_w, conv_b, cls_emb, pos_emb, patch_size,
                compute_dtype=jnp.bfloat16, batch_block=None):
    """x: [bs, C, H, W] (NCHW, like PyTorch). Returns [bs, N+1, hidden]."""
    bs, C, H, W = x.shape
    p = patch_size
    hidden = conv_w.shape[0]
    Hp, Wp = H // p, W // p
    N = Hp * Wp
    Cpp = C * p * p
    out_dtype = x.dtype

    # --- wrapper-side prep (layout + constant folding, done once) ------------
    # TODO(synk): fuse this patch rearrangement into the upstream producer to
    # avoid the extra HBM round-trip of the materialized [bs, N, Cpp] copy
    # (cast to bf16 first so the copy is half-size).
    xc = x.astype(compute_dtype)
    patches = xc.reshape(bs, C, Hp, p, Wp, p).transpose(0, 2, 4, 1, 3, 5)
    patches = patches.reshape(bs, N, Cpp)
    w_t = conv_w.reshape(hidden, Cpp).T.astype(compute_dtype)       # (Cpp, hidden)

    # Fold cls token and conv bias into the positional embedding (kept f32).
    pos2 = pos_emb.reshape(N + 1, hidden).astype(jnp.float32)
    pos_adj = jnp.concatenate(
        [pos2[0:1, :] + cls_emb.reshape(1, hidden).astype(jnp.float32),
         pos2[1:, :] + conv_b.reshape(1, hidden).astype(jnp.float32)],
        axis=0)                                                      # (N+1, hidden)

    # --- batch blocking: amortize per-step overhead, fill the MXU ------------
    in_b = jnp.dtype(compute_dtype).itemsize
    out_b = jnp.dtype(out_dtype).itemsize
    const_bytes = Cpp * hidden * in_b + (N + 1) * hidden * 4
    budget = 40 * 1024 * 1024 - 2 * const_bytes     # streaming-block budget
    if batch_block is None:
        batch_block = _choose_batch_block(bs, N, Cpp, hidden, in_b, out_b, budget)
    B_blk = batch_block
    assert bs % B_blk == 0, "batch_block must divide bs"
    n_blocks = bs // B_blk

    need = (2 * B_blk * N * Cpp * in_b
            + 2 * B_blk * (N + 1) * hidden * out_b
            + 2 * const_bytes)
    vmem_limit = int(min(48 * 1024 * 1024,
                         max(need + 4 * 1024 * 1024, 16 * 1024 * 1024)))

    def run(single_buffer_consts):
        # weight / pos_adj are grid-invariant: single-buffer them (no benefit
        # from double-buffering, halves their VMEM footprint).
        const_kw = ({"pipeline_mode": pl.Buffered(1)}
                    if single_buffer_consts else {})
        call = pl.pallas_call(
            emb_kernel,
            out_shape=jax.ShapeDtypeStruct((bs, N + 1, hidden), out_dtype),
            grid=(n_blocks,),
            in_specs=[
                pl.BlockSpec((B_blk, N, Cpp), lambda g: (g, 0, 0)),
                pl.BlockSpec((Cpp, hidden), lambda g: (0, 0), **const_kw),
                pl.BlockSpec((N + 1, hidden), lambda g: (0, 0), **const_kw),
            ],
            out_specs=pl.BlockSpec((B_blk, N + 1, hidden), lambda g: (g, 0, 0)),
            compiler_params=pltpu.CompilerParams(
                dimension_semantics=("parallel",),
                vmem_limit_bytes=vmem_limit,
            ),
        )
        out = call(patches, w_t, pos_adj)
        return jax.block_until_ready(out)

    try:
        return run(True)
    except Exception:
        # Fallback for jax versions without BlockSpec(pipeline_mode=...) /
        # Buffered(1): default double-buffering (correctness unchanged).
        return run(False)


if __name__ == "__main__":
    # small shapes consistent with the module
    bs, C, img_size, patch_size, hidden = 2, 4, 16, 4, 32
    Hp = img_size // patch_size
    N = Hp * Hp
    Cpp = C * patch_size * patch_size

    key = jax.random.PRNGKey(0)
    kx, kw, kb, kc, kp = jax.random.split(key, 5)

    x = jax.random.normal(kx, (bs, C, img_size, img_size), dtype=jnp.float32)

    # deterministic "xavier-like" parameter init (synthetic, not a checkpoint)
    fan = Cpp + hidden
    limit = (6.0 / fan) ** 0.5
    conv_w = jax.random.uniform(
        kw, (hidden, C, patch_size, patch_size), minval=-limit, maxval=limit,
        dtype=jnp.float32)
    conv_b = jax.random.uniform(kb, (hidden,), minval=-0.1, maxval=0.1,
                                dtype=jnp.float32)
    cls_emb = jax.random.uniform(kc, (1, 1, hidden), minval=-0.02, maxval=0.02,
                                 dtype=jnp.float32)
    pos_emb = jax.random.uniform(kp, (1, N + 1, hidden), minval=-0.02,
                                 maxval=0.02, dtype=jnp.float32)

    out = emb_forward(x, conv_w, conv_b, cls_emb, pos_emb, patch_size)
    out = jax.block_until_ready(out)
    assert out.shape == (bs, N + 1, hidden)

    # Reference 1: same bf16-input / f32-accumulate precision policy (tight).
    patches_r = x.reshape(bs, C, Hp, patch_size, Hp, patch_size)
    patches_r = patches_r.transpose(0, 2, 4, 1, 3, 5).reshape(bs, N, Cpp)
    pe_bf16 = jnp.einsum(
        "bnc,ch->bnh",
        patches_r.astype(jnp.bfloat16),
        conv_w.reshape(hidden, Cpp).T.astype(jnp.bfloat16),
        preferred_element_type=jnp.float32) + conv_b[None, None, :]
    ref_bf16 = jnp.concatenate(
        [jnp.broadcast_to(cls_emb, (bs, 1, hidden)), pe_bf16], axis=1) + pos_emb
    assert jnp.allclose(out, ref_bf16, atol=1e-4, rtol=1e-4)

    # Reference 2: full f32 PyTorch-equivalent math (loose, bf16 operand cast).
    ref_conv = jax.lax.conv_general_dilated(
        x, conv_w, (patch_size, patch_size), "VALID",
        dimension_numbers=("NCHW", "OIHW", "NCHW"),
    ) + conv_b[None, :, None, None]
    ref_patch = ref_conv.reshape(bs, hidden, -1).transpose(0, 2, 1)
    ref_f32 = jnp.concatenate(
        [jnp.broadcast_to(cls_emb, (bs, 1, hidden)), ref_patch], axis=1) + pos_emb
    assert jnp.allclose(out, ref_f32, atol=5e-2, rtol=5e-2)

    print("KERNEL_OK")
</pallas_src>

<mosaic_0001>
module attributes {stable_mosaic.version = 11 : i64} {
  func.func @emb_kernel(%arg0: i32, %arg1: memref<2x16x64xbf16, #tpu.memory_space<vmem>>, %arg2: memref<64x32xbf16, #tpu.memory_space<vmem>>, %arg3: memref<17x32xf32, #tpu.memory_space<vmem>>, %arg4: memref<2x17x32xf32, #tpu.memory_space<vmem>>) attributes {dimension_semantics = [#tpu.dimension_semantics<parallel>], iteration_bounds = array<i64: 1>, scalar_prefetch = 0 : i64, scratch_operands = 0 : i64, tpu.core_type = #tpu.core_type<tc>, window_params = [{transform_indices = @transform_0, window_bounds = array<i64: 2, 16, 64>}, {pipeline_mode = #tpu.pipeline_mode<synchronous>, transform_indices = @transform_1, window_bounds = array<i64: 64, 32>}, {pipeline_mode = #tpu.pipeline_mode<synchronous>, transform_indices = @transform_2, window_bounds = array<i64: 17, 32>}, {transform_indices = @transform_3, window_bounds = array<i64: 2, 17, 32>}]} {
    %c0 = arith.constant 0 : index
    %c0_0 = arith.constant 0 : index
    %c0_1 = arith.constant 0 : index
    %0 = vector.load %arg1[%c0, %c0_0, %c0_1] : memref<2x16x64xbf16, #tpu.memory_space<vmem>>, vector<2x16x64xbf16>
    %1 = vector.shape_cast %0 : vector<2x16x64xbf16> to vector<32x64xbf16>
    %c0_2 = arith.constant 0 : index
    %c0_3 = arith.constant 0 : index
    %2 = vector.load %arg2[%c0_2, %c0_3] : memref<64x32xbf16, #tpu.memory_space<vmem>>, vector<64x32xbf16>
    %cst = arith.constant dense<0.000000e+00> : vector<32x32xf32>
    %3 = tpu.matmul %1, %2, %cst {dimension_numbers = #tpu.dot_dimension_numbers<[1], [0], [0], [1], [0, 0, 1, 1], [], []>} : vector<32x64xbf16>, vector<64x32xbf16>, vector<32x32xf32> -> vector<32x32xf32>
    %c0_4 = arith.constant 0 : index
    %c0_5 = arith.constant 0 : index
    %4 = vector.load %arg3[%c0_4, %c0_5] : memref<17x32xf32, #tpu.memory_space<vmem>>, vector<1x32xf32>
    %c1 = arith.constant 1 : index
    %c0_6 = arith.constant 0 : index
    %5 = vector.load %arg3[%c1, %c0_6] : memref<17x32xf32, #tpu.memory_space<vmem>>, vector<16x32xf32>
    %c0_7 = arith.constant 0 : index
    %c0_8 = arith.constant 0 : index
    %c0_9 = arith.constant 0 : index
    %6 = vector.load %arg4[%c0_7, %c0_8, %c0_9] : memref<2x17x32xf32, #tpu.memory_space<vmem>>, vector<1x1x32xf32>
    %7 = vector.shape_cast %6 : vector<1x1x32xf32> to vector<1x32xf32>
    %8 = vector.shape_cast %4 : vector<1x32xf32> to vector<1x1x32xf32>
    tpu.vector_store %arg4[%c0_7, %c0_8, %c0_9], %8 {strides = array<i32>} : memref<2x17x32xf32, #tpu.memory_space<vmem>>, vector<1x1x32xf32>,
    %9 = vector.extract_strided_slice %3 {offsets = [0, 0], sizes = [16, 32], strides = [1, 1]} : vector<32x32xf32> to vector<16x32xf32>
    %10 = arith.addf %9, %5 : vector<16x32xf32>
    %c0_10 = arith.constant 0 : index
    %c1_11 = arith.constant 1 : index
    %c0_12 = arith.constant 0 : index
    %11 = vector.load %arg4[%c0_10, %c1_11, %c0_12] : memref<2x17x32xf32, #tpu.memory_space<vmem>>, vector<1x16x32xf32>
    %12 = vector.shape_cast %11 : vector<1x16x32xf32> to vector<16x32xf32>
    %13 = vector.shape_cast %10 : vector<16x32xf32> to vector<1x16x32xf32>
    tpu.vector_store %arg4[%c0_10, %c1_11, %c0_12], %13 {strides = array<i32>} : memref<2x17x32xf32, #tpu.memory_space<vmem>>, vector<1x16x32xf32>,
    %c1_13 = arith.constant 1 : index
    %c0_14 = arith.constant 0 : index
    %c0_15 = arith.constant 0 : index
    %14 = vector.load %arg4[%c1_13, %c0_14, %c0_15] : memref<2x17x32xf32, #tpu.memory_space<vmem>>, vector<1x1x32xf32>
    %15 = vector.shape_cast %14 : vector<1x1x32xf32> to vector<1x32xf32>
    %16 = vector.shape_cast %4 : vector<1x32xf32> to vector<1x1x32xf32>
    tpu.vector_store %arg4[%c1_13, %c0_14, %c0_15], %16 {strides = array<i32>} : memref<2x17x32xf32, #tpu.memory_space<vmem>>, vector<1x1x32xf32>,
    %17 = vector.extract_strided_slice %3 {offsets = [16, 0], sizes = [16, 32], strides = [1, 1]} : vector<32x32xf32> to vector<16x32xf32>
    %18 = arith.addf %17, %5 : vector<16x32xf32>
    %c1_16 = arith.constant 1 : index
    %c1_17 = arith.constant 1 : index
    %c0_18 = arith.constant 0 : index
    %19 = vector.load %arg4[%c1_16, %c1_17, %c0_18] : memref<2x17x32xf32, #tpu.memory_space<vmem>>, vector<1x16x32xf32>
    %20 = vector.shape_cast %19 : vector<1x16x32xf32> to vector<16x32xf32>
    %21 = vector.shape_cast %18 : vector<16x32xf32> to vector<1x16x32xf32>
    tpu.vector_store %arg4[%c1_16, %c1_17, %c0_18], %21 {strides = array<i32>} : memref<2x17x32xf32, #tpu.memory_space<vmem>>, vector<1x16x32xf32>,
    return
  }
  func.func @transform_0(%arg0: i32) -> (i32, i32, i32) {
    %c0_i32 = arith.constant 0 : i32
    %c0_i32_0 = arith.constant 0 : i32
    %c0_i32_1 = arith.constant 0 : i32
    return %arg0, %c0_i32, %c0_i32_0 : i32, i32, i32
  }
  func.func @transform_1(%arg0: i32) -> (i32, i32) {
    %c0_i32 = arith.constant 0 : i32
    %c0_i32_0 = arith.constant 0 : i32
    %c0_i32_1 = arith.constant 0 : i32
    return %c0_i32, %c0_i32_0 : i32, i32
  }
  func.func @transform_2(%arg0: i32) -> (i32, i32) {
    %c0_i32 = arith.constant 0 : i32
    %c0_i32_0 = arith.constant 0 : i32
    %c0_i32_1 = arith.constant 0 : i32
    return %c0_i32, %c0_i32_0 : i32, i32
  }
  func.func @transform_3(%arg0: i32) -> (i32, i32, i32) {
    %c0_i32 = arith.constant 0 : i32
    %c0_i32_0 = arith.constant 0 : i32
    %c0_i32_1 = arith.constant 0 : i32
    return %arg0, %c0_i32, %c0_i32_0 : i32, i32, i32
  }
}

module attributes {stable_mosaic.version = 11 : i64} {
  func.func @emb_kernel(%arg0: i32, %arg1: memref<2x16x64xbf16, #tpu.memory_space<vmem>>, %arg2: memref<64x32xbf16, #tpu.memory_space<vmem>>, %arg3: memref<17x32xf32, #tpu.memory_space<vmem>>, %arg4: memref<2x17x32xf32, #tpu.memory_space<vmem>>) attributes {dimension_semantics = [#tpu.dimension_semantics<parallel>], iteration_bounds = array<i64: 1>, scalar_prefetch = 0 : i64, scratch_operands = 0 : i64, tpu.core_type = #tpu.core_type<tc>, window_params = [{transform_indices = @transform_0, window_bounds = array<i64: 2, 16, 64>}, {pipeline_mode = #tpu.pipeline_mode<synchronous>, transform_indices = @transform_1, window_bounds = array<i64: 64, 32>}, {pipeline_mode = #tpu.pipeline_mode<synchronous>, transform_indices = @transform_2, window_bounds = array<i64: 17, 32>}, {transform_indices = @transform_3, window_bounds = array<i64: 2, 17, 32>}]} {
    %c0 = arith.constant 0 : index
    %c0_0 = arith.constant 0 : index
    %c0_1 = arith.constant 0 : index
    %0 = vector.load %arg1[%c0, %c0_0, %c0_1] : memref<2x16x64xbf16, #tpu.memory_space<vmem>>, vector<2x16x64xbf16>
    %1 = vector.shape_cast %0 : vector<2x16x64xbf16> to vector<32x64xbf16>
    %c0_2 = arith.constant 0 : index
    %c0_3 = arith.constant 0 : index
    %2 = vector.load %arg2[%c0_2, %c0_3] : memref<64x32xbf16, #tpu.memory_space<vmem>>, vector<64x32xbf16>
    %cst = arith.constant dense<0.000000e+00> : vector<32x32xf32>
    %3 = tpu.matmul %1, %2, %cst {dimension_numbers = #tpu.dot_dimension_numbers<[1], [0], [0], [1], [0, 0, 1, 1], [], []>} : vector<32x64xbf16>, vector<64x32xbf16>, vector<32x32xf32> -> vector<32x32xf32>
    %c0_4 = arith.constant 0 : index
    %c0_5 = arith.constant 0 : index
    %4 = vector.load %arg3[%c0_4, %c0_5] : memref<17x32xf32, #tpu.memory_space<vmem>>, vector<1x32xf32>
    %c1 = arith.constant 1 : index
    %c0_6 = arith.constant 0 : index
    %5 = vector.load %arg3[%c1, %c0_6] : memref<17x32xf32, #tpu.memory_space<vmem>>, vector<16x32xf32>
    %c0_7 = arith.constant 0 : index
    %c0_8 = arith.constant 0 : index
    %c0_9 = arith.constant 0 : index
    %6 = vector.load %arg4[%c0_7, %c0_8, %c0_9] : memref<2x17x32xf32, #tpu.memory_space<vmem>>, vector<1x1x32xf32>
    %7 = vector.shape_cast %6 : vector<1x1x32xf32> to vector<1x32xf32>
    %8 = vector.shape_cast %4 : vector<1x32xf32> to vector<1x1x32xf32>
    tpu.vector_store %arg4[%c0_7, %c0_8, %c0_9], %8 {strides = array<i32>} : memref<2x17x32xf32, #tpu.memory_space<vmem>>, vector<1x1x32xf32>,
    %9 = vector.extract_strided_slice %3 {offsets = [0, 0], sizes = [16, 32], strides = [1, 1]} : vector<32x32xf32> to vector<16x32xf32>
    %10 = arith.addf %9, %5 : vector<16x32xf32>
    %c0_10 = arith.constant 0 : index
    %c1_11 = arith.constant 1 : index
    %c0_12 = arith.constant 0 : index
    %11 = vector.load %arg4[%c0_10, %c1_11, %c0_12] : memref<2x17x32xf32, #tpu.memory_space<vmem>>, vector<1x16x32xf32>
    %12 = vector.shape_cast %11 : vector<1x16x32xf32> to vector<16x32xf32>
    %13 = vector.shape_cast %10 : vector<16x32xf32> to vector<1x16x32xf32>
    tpu.vector_store %arg4[%c0_10, %c1_11, %c0_12], %13 {strides = array<i32>} : memref<2x17x32xf32, #tpu.memory_space<vmem>>, vector<1x16x32xf32>,
    %c1_13 = arith.constant 1 : index
    %c0_14 = arith.constant 0 : index
    %c0_15 = arith.constant 0 : index
    %14 = vector.load %arg4[%c1_13, %c0_14, %c0_15] : memref<2x17x32xf32, #tpu.memory_space<vmem>>, vector<1x1x32xf32>
    %15 = vector.shape_cast %14 : vector<1x1x32xf32> to vector<1x32xf32>
    %16 = vector.shape_cast %4 : vector<1x32xf32> to vector<1x1x32xf32>
    tpu.vector_store %arg4[%c1_13, %c0_14, %c0_15], %16 {strides = array<i32>} : memref<2x17x32xf32, #tpu.memory_space<vmem>>, vector<1x1x32xf32>,
    %17 = vector.extract_strided_slice %3 {offsets = [16, 0], sizes = [16, 32], strides = [1, 1]} : vector<32x32xf32> to vector<16x32xf32>
    %18 = arith.addf %17, %5 : vector<16x32xf32>
    %c1_16 = arith.constant 1 : index
    %c1_17 = arith.constant 1 : index
    %c0_18 = arith.constant 0 : index
    %19 = vector.load %arg4[%c1_16, %c1_17, %c0_18] : memref<2x17x32xf32, #tpu.memory_space<vmem>>, vector<1x16x32xf32>
    %20 = vector.shape_cast %19 : vector<1x16x32xf32> to vector<16x32xf32>
    %21 = vector.shape_cast %18 : vector<16x32xf32> to vector<1x16x32xf32>
    tpu.vector_store %arg4[%c1_16, %c1_17, %c0_18], %21 {strides = array<i32>} : memref<2x17x32xf32, #tpu.memory_space<vmem>>, vector<1x16x32xf32>,
    return
  }
  func.func @transform_0(%arg0: i32) -> (i32, i32, i32) {
    %c0_i32 = arith.constant 0 : i32
    %c0_i32_0 = arith.constant 0 : i32
    %c0_i32_1 = arith.constant 0 : i32
    return %arg0, %c0_i32, %c0_i32_0 : i32, i32, i32
  }
  func.func @transform_1(%arg0: i32) -> (i32, i32) {
    %c0_i32 = arith.constant 0 : i32
    %c0_i32_0 = arith.constant 0 : i32
    %c0_i32_1 = arith.constant 0 : i32
    return %c0_i32, %c0_i32_0 : i32, i32
  }
  func.func @transform_2(%arg0: i32) -> (i32, i32) {
    %c0_i32 = arith.constant 0 : i32
    %c0_i32_0 = arith.constant 0 : i32
    %c0_i32_1 = arith.constant 0 : i32
    return %c0_i32, %c0_i32_0 : i32, i32
  }
  func.func @transform_3(%arg0: i32) -> (i32, i32, i32) {
    %c0_i32 = arith.constant 0 : i32
    %c0_i32_0 = arith.constant 0 : i32
    %c0_i32_1 = arith.constant 0 : i32
    return %arg0, %c0_i32, %c0_i32_0 : i32, i32, i32
  }
}

</mosaic_0001>

<llo_original>
// kernel: tpu_custom_call.1
$region0: #{tpu_custom_call.1}
  #allocation0 [shape = 'u32[]', space=smem, size = 0x4, offset = 0x4, fixed_abs, tag = 'smem constant byte address 0x4 - core index']
  #allocation1 [shape = 'u32[144,128]{1,0:T(1,128)}', space=vmem, size = 0x12000, scoped, tag = 'internal scratch']
  %s0 = inlined_call_operand.vmem [shape: bf16[2,16,64], index: 0, kind: input, shape index: {}]
  %s1 = inlined_call_operand.vmem [shape: bf16[64,32], index: 1, kind: input, shape index: {}]
  %s2 = inlined_call_operand.vmem [shape: f32[17,32], index: 2, kind: input, shape index: {}]
  %s3 = inlined_call_operand.vmem [shape: f32[2,17,32], index: 3, kind: output, shape index: {}]
  %s4 = sld [smem:[#allocation0]]
  $region22: #{tpu_custom_call.1} parent=0
    _
  %s6 = ssub.s32 1, %s4
  %s7 = scalar_select 0, %s6, %s4
  // Predicated region
  $region2: #{tpu_custom_call.1} parent=0 // pred_check
    _
  $region3: #{tpu_custom_call.1} parent=0 // pred_check_branch
    %9 = sbr.rel (0) target = $region5
  $region4: #{tpu_custom_call.1} parent=0 // pred_region
    _
  $region5: #{tpu_custom_call.1} parent=0 // pred_fallthru
    _
  // Predicated region
  $region6: #{tpu_custom_call.1} parent=0 // pred_check
    _
  $region7: #{tpu_custom_call.1} parent=0 // pred_check_branch
    %11 = sbr.rel (0) target = $region9
  $region8: #{tpu_custom_call.1} parent=0 // pred_region
    _
  $region9: #{tpu_custom_call.1} parent=0 // pred_fallthru
    _
  // Predicated region
  $region10: #{tpu_custom_call.1} parent=0 // pred_check
    _
  $region11: #{tpu_custom_call.1} parent=0 // pred_check_branch
    %13 = sbr.rel (0) target = $region13
  $region12: #{tpu_custom_call.1} parent=0 // pred_region
    _
  $region13: #{tpu_custom_call.1} parent=0 // pred_fallthru
    _
  %v15 = vld [vmem:[%s0] sm:$0xf]
  %v16 = vld [vmem:[%s0 + $0x4] sm:$0xf]
  %v17 = vld [vmem:[%s0 + $0x8] sm:$0xf]
  %v18 = vld [vmem:[%s0 + $0xc] sm:$0xf]
  %v19 = vld [vmem:[%s1] sm:$0xf]
  %v20 = vld [vmem:[%s1 + $0x4] sm:$0xf]
  %v21 = vld [vmem:[%s1 + $0x8] sm:$0xf]
  %v22 = vld [vmem:[%s1 + $0xc] sm:$0xf]
  %v23 = vld [vmem:[%s1 + $0x10] sm:$0xf]
  %v24 = vld [vmem:[%s1 + $0x14] sm:$0xf]
  %v25 = vld [vmem:[%s1 + $0x18] sm:$0xf]
  %v26 = vld [vmem:[%s1 + $0x1c] sm:$0xf]
  %v31 = vunpack.c.l.b16 %v15
  %v32 = vunpack.c.l.b16 %v16
  %v33 = vunpack.c.l.b16 %v17
  %v34 = vunpack.c.l.b16 %v18
  %v35 = vpack.c.b16 %v32, %v31
  %v36 = vpack.c.b16 %v34, %v33
  %v45 = vunpack.c.l.b16 %v19
  %v46 = vunpack.c.l.b16 %v20
  %v47 = vunpack.c.l.b16 %v21
  %v48 = vunpack.c.l.b16 %v22
  %v49 = vunpack.c.l.b16 %v23
  %v50 = vunpack.c.l.b16 %v24
  %v51 = vunpack.c.l.b16 %v25
  %v52 = vunpack.c.l.b16 %v26
  %v53 = vpack.c.b16 %v46, %v45
  %v54 = vpack.c.b16 %v48, %v47
  %v55 = vpack.c.b16 %v50, %v49
  %v56 = vpack.c.b16 %v52, %v51
  %vm61 = vcmask 523264
  %v63 = vsel %vm61, %v35, 0
  %v66 = vsel %vm61, %v36, 0
  %68 = vmatprep.subr.bf16.mxu0 0
  %69 = vmatpush1.bf16.msra.mxu0 %v53
  %70 = vmatprep.subr.bf16.mxu0 0
  %71 = vmatpush1.bf16.msra.mxu0 %v54
  %72 = vmatprep.subr.bf16.mxu0 0
  %73 = vmatpush1.bf16.msra.mxu0 %v55
  %74 = vmatprep.subr.bf16.mxu0 0
  %75 = vmatpush1.bf16.msra.mxu0 %v56
  %76 = vmatprep.subr.bf16.mxu0 0
  %77 = vmatpush1.bf16.msra.mxu0 0
  %78 = vmatprep.subr.bf16.mxu0 0
  %79 = vmatpush1.bf16.msra.mxu0 0
  %80 = vmatprep.subr.bf16.mxu0 0
  %81 = vmatpush1.bf16.msra.mxu0 0
  %82 = vmatprep.subr.bf16.mxu0 0
  %83 = vmatpush1.bf16.msra.mxu0 0
  %84 = vmatprep.subr.bf16.mxu0 0
  %85 = vmatpush1.bf16.msra.mxu0 0
  %86 = vmatprep.subr.bf16.mxu0 0
  %87 = vmatpush1.bf16.msra.mxu0 0
  %88 = vmatprep.subr.bf16.mxu0 0
  %89 = vmatpush1.bf16.msra.mxu0 0
  %90 = vmatprep.subr.bf16.mxu0 0
  %91 = vmatpush1.bf16.msra.mxu0 0
  %92 = vmatprep.subr.bf16.mxu0 0
  %93 = vmatpush1.bf16.msra.mxu0 0
  %94 = vmatprep.subr.bf16.mxu0 0
  %95 = vmatpush1.bf16.msra.mxu0 0
  %96 = vmatprep.subr.bf16.mxu0 0
  %97 = vmatpush1.bf16.msra.mxu0 0
  %98 = vmatprep.subr.bf16.mxu0 0
  %99 = vmatpush1.bf16.msra.mxu0 0
  %100 = vmatprep.mubr.bf16.mxu0 0
  %101 = vmatmul.mubr.bf16.gmra.mrb[0].mxu0 %v63
  %v102 = vpop.f32.mrb[0].mxu0
  %v103 = vadd.f32 0.0, %v102
  %v104 = vpop.f32.mrb[0].mxu0
  %v105 = vpop.f32.mrb[0].mxu0
  %v106 = vadd.f32 0.0, %v105
  %v107 = vpop.f32.mrb[0].mxu0
  %108 = vmatprep.mubr.bf16.mxu0 0
  %109 = vmatmul.mubr.bf16.gmra.mrb[0].mxu0 %v66
  %v110 = vpop.f32.mrb[0].mxu0
  %v111 = vadd.f32 0.0, %v110
  %v112 = vpop.f32.mrb[0].mxu0
  %v113 = vpop.f32.mrb[0].mxu0
  %v114 = vadd.f32 0.0, %v113
  %v115 = vpop.f32.mrb[0].mxu0
  %116 = vdwg.mxu0
  %v117 = vld [vmem:[%s2] sm:$0x1]
  %v118 = vld [vmem:[%s2 + $0x1] sm:$0xff]
  %v119 = vld [vmem:[%s2 + $0x9] sm:$0xff]
  %vm120 = vcmask 253952
  %121 = vst.msk [vmem:[%s3] sm:$0x1] %vm120, %v117
  %v122 = vadd.f32 %v103, %v118
  %v123 = vadd.f32 %v106, %v119
  %vm124 = vcmask 261120
  %125 = vst.msk [vmem:[%s3 + $0x1] sm:$0xff] %vm124, %v122
  %126 = vst.msk [vmem:[%s3 + $0x9] sm:$0xff] %vm124, %v123
  %s127 = scalar_lea.vmem %s3, 24
  %128 = vst.msk [vmem:[%s127] sm:$0x1] %vm120, %v117
  %v129 = vadd.f32 %v111, %v118
  %v130 = vadd.f32 %v114, %v119
  %131 = vst.msk [vmem:[%s127 + $0x1] sm:$0xff] %vm124, %v129
  %132 = vst.msk [vmem:[%s127 + $0x9] sm:$0xff] %vm124, %v130
  // Predicated region
  $region14: #{tpu_custom_call.1} parent=0 // pred_check
    _
  $region15: #{tpu_custom_call.1} parent=0 // pred_check_branch
    %134 = sbr.rel (0) target = $region17
  $region16: #{tpu_custom_call.1} parent=0 // pred_region
    _
  $region17: #{tpu_custom_call.1} parent=0 // pred_fallthru
    _
  // Predicated region
  $region18: #{tpu_custom_call.1} parent=0 // pred_check
    _
  $region19: #{tpu_custom_call.1} parent=0 // pred_check_branch
    %136 = sbr.rel (0) target = $region21
  $region20: #{tpu_custom_call.1} parent=0 // pred_region
    _
  $region21: #{tpu_custom_call.1} parent=0 // pred_fallthru
    _

// kernel: tpu_custom_call.1
$region0: #{tpu_custom_call.1}
  #allocation0 [shape = 'u32[]', space=smem, size = 0x4, offset = 0x4, fixed_abs, tag = 'smem constant byte address 0x4 - core index']
  #allocation1 [shape = 'u32[144,128]{1,0:T(1,128)}', space=vmem, size = 0x12000, scoped, tag = 'internal scratch']
  %s0 = inlined_call_operand.vmem [shape: bf16[2,16,64], index: 0, kind: input, shape index: {}]
  %s1 = inlined_call_operand.vmem [shape: bf16[64,32], index: 1, kind: input, shape index: {}]
  %s2 = inlined_call_operand.vmem [shape: f32[17,32], index: 2, kind: input, shape index: {}]
  %s3 = inlined_call_operand.vmem [shape: f32[2,17,32], index: 3, kind: output, shape index: {}]
  %s4 = sld [smem:[#allocation0]]
  $region22: #{tpu_custom_call.1} parent=0
    _
  %s6 = ssub.s32 1, %s4
  %s7 = scalar_select 0, %s6, %s4
  // Predicated region
  $region2: #{tpu_custom_call.1} parent=0 // pred_check
    _
  $region3: #{tpu_custom_call.1} parent=0 // pred_check_branch
    %9 = sbr.rel (0) target = $region5
  $region4: #{tpu_custom_call.1} parent=0 // pred_region
    _
  $region5: #{tpu_custom_call.1} parent=0 // pred_fallthru
    _
  // Predicated region
  $region6: #{tpu_custom_call.1} parent=0 // pred_check
    _
  $region7: #{tpu_custom_call.1} parent=0 // pred_check_branch
    %11 = sbr.rel (0) target = $region9
  $region8: #{tpu_custom_call.1} parent=0 // pred_region
    _
  $region9: #{tpu_custom_call.1} parent=0 // pred_fallthru
    _
  // Predicated region
  $region10: #{tpu_custom_call.1} parent=0 // pred_check
    _
  $region11: #{tpu_custom_call.1} parent=0 // pred_check_branch
    %13 = sbr.rel (0) target = $region13
  $region12: #{tpu_custom_call.1} parent=0 // pred_region
    _
  $region13: #{tpu_custom_call.1} parent=0 // pred_fallthru
    _
  %v15 = vld [vmem:[%s0] sm:$0xf]
  %v16 = vld [vmem:[%s0 + $0x4] sm:$0xf]
  %v17 = vld [vmem:[%s0 + $0x8] sm:$0xf]
  %v18 = vld [vmem:[%s0 + $0xc] sm:$0xf]
  %v19 = vld [vmem:[%s1] sm:$0xf]
  %v20 = vld [vmem:[%s1 + $0x4] sm:$0xf]
  %v21 = vld [vmem:[%s1 + $0x8] sm:$0xf]
  %v22 = vld [vmem:[%s1 + $0xc] sm:$0xf]
  %v23 = vld [vmem:[%s1 + $0x10] sm:$0xf]
  %v24 = vld [vmem:[%s1 + $0x14] sm:$0xf]
  %v25 = vld [vmem:[%s1 + $0x18] sm:$0xf]
  %v26 = vld [vmem:[%s1 + $0x1c] sm:$0xf]
  %v31 = vunpack.c.l.b16 %v15
  %v32 = vunpack.c.l.b16 %v16
  %v33 = vunpack.c.l.b16 %v17
  %v34 = vunpack.c.l.b16 %v18
  %v35 = vpack.c.b16 %v32, %v31
  %v36 = vpack.c.b16 %v34, %v33
  %v45 = vunpack.c.l.b16 %v19
  %v46 = vunpack.c.l.b16 %v20
  %v47 = vunpack.c.l.b16 %v21
  %v48 = vunpack.c.l.b16 %v22
  %v49 = vunpack.c.l.b16 %v23
  %v50 = vunpack.c.l.b16 %v24
  %v51 = vunpack.c.l.b16 %v25
  %v52 = vunpack.c.l.b16 %v26
  %v53 = vpack.c.b16 %v46, %v45
  %v54 = vpack.c.b16 %v48, %v47
  %v55 = vpack.c.b16 %v50, %v49
  %v56 = vpack.c.b16 %v52, %v51
  %vm61 = vcmask 523264
  %v63 = vsel %vm61, %v35, 0
  %v66 = vsel %vm61, %v36, 0
  %68 = vmatprep.subr.bf16.mxu0 0
  %69 = vmatpush1.bf16.msra.mxu0 %v53
  %70 = vmatprep.subr.bf16.mxu0 0
  %71 = vmatpush1.bf16.msra.mxu0 %v54
  %72 = vmatprep.subr.bf16.mxu0 0
  %73 = vmatpush1.bf16.msra.mxu0 %v55
  %74 = vmatprep.subr.bf16.mxu0 0
  %75 = vmatpush1.bf16.msra.mxu0 %v56
  %76 = vmatprep.subr.bf16.mxu0 0
  %77 = vmatpush1.bf16.msra.mxu0 0
  %78 = vmatprep.subr.bf16.mxu0 0
  %79 = vmatpush1.bf16.msra.mxu0 0
  %80 = vmatprep.subr.bf16.mxu0 0
  %81 = vmatpush1.bf16.msra.mxu0 0
  %82 = vmatprep.subr.bf16.mxu0 0
  %83 = vmatpush1.bf16.msra.mxu0 0
  %84 = vmatprep.subr.bf16.mxu0 0
  %85 = vmatpush1.bf16.msra.mxu0 0
  %86 = vmatprep.subr.bf16.mxu0 0
  %87 = vmatpush1.bf16.msra.mxu0 0
  %88 = vmatprep.subr.bf16.mxu0 0
  %89 = vmatpush1.bf16.msra.mxu0 0
  %90 = vmatprep.subr.bf16.mxu0 0
  %91 = vmatpush1.bf16.msra.mxu0 0
  %92 = vmatprep.subr.bf16.mxu0 0
  %93 = vmatpush1.bf16.msra.mxu0 0
  %94 = vmatprep.subr.bf16.mxu0 0
  %95 = vmatpush1.bf16.msra.mxu0 0
  %96 = vmatprep.subr.bf16.mxu0 0
  %97 = vmatpush1.bf16.msra.mxu0 0
  %98 = vmatprep.subr.bf16.mxu0 0
  %99 = vmatpush1.bf16.msra.mxu0 0
  %100 = vmatprep.mubr.bf16.mxu0 0
  %101 = vmatmul.mubr.bf16.gmra.mrb[0].mxu0 %v63
  %v102 = vpop.f32.mrb[0].mxu0
  %v103 = vadd.f32 0.0, %v102
  %v104 = vpop.f32.mrb[0].mxu0
  %v105 = vpop.f32.mrb[0].mxu0
  %v106 = vadd.f32 0.0, %v105
  %v107 = vpop.f32.mrb[0].mxu0
  %108 = vmatprep.mubr.bf16.mxu0 0
  %109 = vmatmul.mubr.bf16.gmra.mrb[0].mxu0 %v66
  %v110 = vpop.f32.mrb[0].mxu0
  %v111 = vadd.f32 0.0, %v110
  %v112 = vpop.f32.mrb[0].mxu0
  %v113 = vpop.f32.mrb[0].mxu0
  %v114 = vadd.f32 0.0, %v113
  %v115 = vpop.f32.mrb[0].mxu0
  %116 = vdwg.mxu0
  %v117 = vld [vmem:[%s2] sm:$0x1]
  %v118 = vld [vmem:[%s2 + $0x1] sm:$0xff]
  %v119 = vld [vmem:[%s2 + $0x9] sm:$0xff]
  %vm120 = vcmask 253952
  %121 = vst.msk [vmem:[%s3] sm:$0x1] %vm120, %v117
  %v122 = vadd.f32 %v103, %v118
  %v123 = vadd.f32 %v106, %v119
  %vm124 = vcmask 261120
  %125 = vst.msk [vmem:[%s3 + $0x1] sm:$0xff] %vm124, %v122
  %126 = vst.msk [vmem:[%s3 + $0x9] sm:$0xff] %vm124, %v123
  %s127 = scalar_lea.vmem %s3, 24
  %128 = vst.msk [vmem:[%s127] sm:$0x1] %vm120, %v117
  %v129 = vadd.f32 %v111, %v118
  %v130 = vadd.f32 %v114, %v119
  %131 = vst.msk [vmem:[%s127 + $0x1] sm:$0xff] %vm124, %v129
  %132 = vst.msk [vmem:[%s127 + $0x9] sm:$0xff] %vm124, %v130
  // Predicated region
  $region14: #{tpu_custom_call.1} parent=0 // pred_check
    _
  $region15: #{tpu_custom_call.1} parent=0 // pred_check_branch
    %134 = sbr.rel (0) target = $region17
  $region16: #{tpu_custom_call.1} parent=0 // pred_region
    _
  $region17: #{tpu_custom_call.1} parent=0 // pred_fallthru
    _
  // Predicated region
  $region18: #{tpu_custom_call.1} parent=0 // pred_check
    _
  $region19: #{tpu_custom_call.1} parent=0 // pred_check_branch
    %136 = sbr.rel (0) target = $region21
  $region20: #{tpu_custom_call.1} parent=0 // pred_region
    _
  $region21: #{tpu_custom_call.1} parent=0 // pred_fallthru
    _

</llo_original>
